<compile_context>
chip_gen: v7x
topology: tpu7x:2x2x1
jax: 0.10.0
libtpu: 0.0.40
codegen_flags: <defaults>
</compile_context>

<pallas_src>
import functools

import jax
import jax.numpy as jnp
from jax import lax
from jax.experimental import pallas as pl
from jax.experimental.pallas import tpu as pltpu


# ----------------------------------------------------------------------------
# Fused SPP kernel: conv1 -> (pool5 x3) -> concat-fused conv2, one image/step
# ----------------------------------------------------------------------------
def _spp_fused_kernel(x_ref, w1_ref, b1_ref, w2_ref, b2_ref, o_ref, *, H, W):
    """
    x_ref : (1, Cin, L)    input image, channels-first, L = H*W
    w1_ref: (C1, Cin)      conv1 weight with BN folded in
    b1_ref: (C1, 1)        conv1 folded bias
    w2_ref: (4, Cout, C1)  conv2 weight, split by concat source [x, y1, y2, y3]
    b2_ref: (Cout, 1)      conv2 folded bias
    o_ref : (1, Cout, L)   output image, channels-first
    """
    L = H * W
    neg = jnp.float32(-jnp.inf)
    C1 = w1_ref.shape[0]

    # ---- conv1 (1x1 conv + folded BN) + SiLU on the MXU ---------------------
    x = x_ref[0]                                              # (Cin, L)
    h = jnp.dot(w1_ref[...], x, preferred_element_type=jnp.float32)
    h = h + b1_ref[...]
    h = h * jax.nn.sigmoid(h)                                 # SiLU, (C1, L)

    # ---- hoisted pool constants (built ONCE, reused by all three pools) -----
    # Column index of each flattened position; masks positions whose
    # W-direction shift would wrap across a row boundary (emulates the -inf
    # pool border on the left/right image edges).
    col = lax.broadcasted_iota(jnp.int32, (C1, L), 1) % W
    valid_fwd = tuple(col < (W - s) for s in (1, 2))   # out[:, l] = a[:, l + s]
    valid_bwd = tuple(col >= s for s in (1, 2))        # out[:, l] = a[:, l - s]
    fill_col = {s: jnp.full((C1, s), neg, jnp.float32) for s in (1, 2)}
    fill_row = {s: jnp.full((C1, s * W), neg, jnp.float32) for s in (1, 2)}

    def shift_fwd(a, k, fill):     # out[:, l] = a[:, l + k], -inf past the end
        return jnp.concatenate([a[:, k:], fill], axis=1)

    def shift_bwd(a, k, fill):     # out[:, l] = a[:, l - k], -inf before start
        return jnp.concatenate([fill, a[:, :L - k]], axis=1)

    # ---- separable 5x5 / stride-1 / pad-2 max pool on (C1, L) ---------------
    def maxpool5(a):
        # horizontal pass (along W): 4 shifted maxima, mask row-wrap positions
        m = a
        for i, s in enumerate((1, 2)):
            m = jnp.maximum(
                m, jnp.where(valid_fwd[i], shift_fwd(a, s, fill_col[s]), neg))
            m = jnp.maximum(
                m, jnp.where(valid_bwd[i], shift_bwd(a, s, fill_col[s]), neg))
        # vertical pass (along H): whole-row shifts, -inf fill handles borders
        out = m
        for s in (1, 2):
            out = jnp.maximum(out, shift_fwd(m, s * W, fill_row[s]))
            out = jnp.maximum(out, shift_bwd(m, s * W, fill_row[s]))
        return out

    # ---- conv2 with the concat fused in: 4 partial matmuls into one acc ----
    acc = jnp.dot(w2_ref[0], h, preferred_element_type=jnp.float32)
    y = maxpool5(h)                                           # y1
    acc = acc + jnp.dot(w2_ref[1], y, preferred_element_type=jnp.float32)
    y = maxpool5(y)                                           # y2
    acc = acc + jnp.dot(w2_ref[2], y, preferred_element_type=jnp.float32)
    y = maxpool5(y)                                           # y3
    acc = acc + jnp.dot(w2_ref[3], y, preferred_element_type=jnp.float32)
    acc = acc + b2_ref[...]
    o_ref[0] = (acc * jax.nn.sigmoid(acc)).astype(o_ref.dtype)   # SiLU


# ----------------------------------------------------------------------------
# Parameter construction: Conv(1x1, bias=False) + BatchNorm2d(eps=1e-3) folded
# ----------------------------------------------------------------------------
def make_conv_bn_params(key, in_ch, out_ch):
    kw, kg, kb, km, kv = jax.random.split(key, 5)
    w = jax.random.normal(kw, (out_ch, in_ch), jnp.float32) * 0.1  # torch (O,I,1,1)
    gamma = jax.random.uniform(kg, (out_ch,), jnp.float32, 0.5, 1.5)
    beta = jax.random.normal(kb, (out_ch,), jnp.float32) * 0.1
    mean = jax.random.normal(km, (out_ch,), jnp.float32) * 0.1
    var = jax.random.uniform(kv, (out_ch,), jnp.float32, 0.5, 1.5)
    eps = 1e-3                                # BatchNorm2d(out_ch, 0.001, 0.03)
    scale = gamma / jnp.sqrt(var + eps)
    w_folded = w * scale[:, None]             # (out_ch, in_ch), channels-first
    b_folded = beta - scale * mean            # (out_ch,)
    return w_folded, b_folded


# ----------------------------------------------------------------------------
# SPP forward (matches the PyTorch module; NCHW in, NCHW out)
# ----------------------------------------------------------------------------
@jax.jit
def spp_forward(x_nchw, params):
    (w1, b1), (w2, b2) = params
    N, Cin, H, W = x_nchw.shape
    C1 = w1.shape[0]
    Cout = w2.shape[0]
    L = H * W

    # NCHW -> (N, Cin, H*W): a trailing-dim collapse, free (no HBM transpose).
    x = x_nchw.reshape(N, Cin, L).astype(jnp.float32)
    # Split conv2 weight by concat source -> (4, Cout, C1).
    w2_split = w2.reshape(Cout, 4, C1).transpose(1, 0, 2).astype(jnp.float32)
    b1c = b1.reshape(C1, 1).astype(jnp.float32)
    b2c = b2.reshape(Cout, 1).astype(jnp.float32)

    kernel = functools.partial(_spp_fused_kernel, H=H, W=W)
    out = pl.pallas_call(
        kernel,
        out_shape=jax.ShapeDtypeStruct((N, Cout, L), jnp.float32),
        grid_spec=pltpu.PrefetchScalarGridSpec(
            num_scalar_prefetch=0,
            grid=(N,),
            in_specs=[
                pl.BlockSpec((1, Cin, L), lambda n: (n, 0, 0)),
                pl.BlockSpec((C1, Cin), lambda n: (0, 0)),
                pl.BlockSpec((C1, 1), lambda n: (0, 0)),
                pl.BlockSpec((4, Cout, C1), lambda n: (0, 0, 0)),
                pl.BlockSpec((Cout, 1), lambda n: (0, 0)),
            ],
            out_specs=pl.BlockSpec((1, Cout, L), lambda n: (n, 0, 0)),
        ),
        compiler_params=pltpu.CompilerParams(
            dimension_semantics=("parallel",)),
    )(x, w1.astype(jnp.float32), b1c, w2_split, b2c)

    return out.reshape(N, Cout, H, W)          # free reshape back to NCHW


# ----------------------------------------------------------------------------
# Pure-JAX reference (no Pallas) for the correctness check
# ----------------------------------------------------------------------------
def _ref_conv_bn_silu(x_nchw, w, b):
    y = jnp.einsum("oc,nchw->nohw", w, x_nchw) + b[None, :, None, None]
    return y * jax.nn.sigmoid(y)


def _ref_maxpool5(x_nchw):
    return lax.reduce_window(
        x_nchw, -jnp.inf, lax.max,
        (1, 1, 5, 5), (1, 1, 1, 1),
        ((0, 0), (0, 0), (2, 2), (2, 2)))


def spp_reference(x_nchw, params):
    (w1, b1), (w2, b2) = params
    h = _ref_conv_bn_silu(x_nchw.astype(jnp.float32), w1, b1)
    y1 = _ref_maxpool5(h)
    y2 = _ref_maxpool5(y1)
    y3 = _ref_maxpool5(y2)
    cat = jnp.concatenate([h, y1, y2, y3], axis=1)
    return _ref_conv_bn_silu(cat, w2, b2)


if __name__ == "__main__":
    # Small shapes consistent with SPP(in_ch=4, out_ch=8, k=5)
    N, IN_CH, OUT_CH, H, W = 2, 4, 8, 16, 16

    key = jax.random.PRNGKey(0)
    kx, k1, k2 = jax.random.split(key, 3)
    x = jax.random.normal(kx, (N, IN_CH, H, W), jnp.float32)

    params = (
        make_conv_bn_params(k1, IN_CH, IN_CH // 2),   # conv1: in_ch -> in_ch//2
        make_conv_bn_params(k2, IN_CH * 2, OUT_CH),   # conv2: 2*in_ch -> out_ch
    )

    out = jax.block_until_ready(spp_forward(x, params))
    ref = jax.block_until_ready(spp_reference(x, params))

    assert out.shape == (N, OUT_CH, H, W)
    assert jnp.allclose(out, ref, atol=1e-4, rtol=1e-3), float(
        jnp.max(jnp.abs(out - ref)))

    print("KERNEL_OK")
</pallas_src>

<mosaic_0001>
module attributes {stable_mosaic.version = 11 : i64} {
  func.func @_spp_fused_kernel(%arg0: i32, %arg1: memref<1x4x256xf32, #tpu.memory_space<vmem>>, %arg2: memref<2x4xf32, #tpu.memory_space<vmem>>, %arg3: memref<2x1xf32, #tpu.memory_space<vmem>>, %arg4: memref<4x8x2xf32, #tpu.memory_space<vmem>>, %arg5: memref<8x1xf32, #tpu.memory_space<vmem>>, %arg6: memref<1x8x256xf32, #tpu.memory_space<vmem>>) attributes {dimension_semantics = [#tpu.dimension_semantics<parallel>], iteration_bounds = array<i64: 2>, scalar_prefetch = 0 : i64, scratch_operands = 0 : i64, tpu.core_type = #tpu.core_type<tc>, window_params = [{transform_indices = @transform_0, window_bounds = array<i64: 1, 4, 256>}, {pipeline_mode = #tpu.pipeline_mode<synchronous>, transform_indices = @transform_1, window_bounds = array<i64: 2, 4>}, {pipeline_mode = #tpu.pipeline_mode<synchronous>, transform_indices = @transform_2, window_bounds = array<i64: 2, 1>}, {pipeline_mode = #tpu.pipeline_mode<synchronous>, transform_indices = @transform_3, window_bounds = array<i64: 4, 8, 2>}, {pipeline_mode = #tpu.pipeline_mode<synchronous>, transform_indices = @transform_4, window_bounds = array<i64: 8, 1>}, {transform_indices = @transform_5, window_bounds = array<i64: 1, 8, 256>}]} {
    %c0 = arith.constant 0 : index
    %c0_0 = arith.constant 0 : index
    %c0_1 = arith.constant 0 : index
    %0 = vector.load %arg1[%c0, %c0_0, %c0_1] : memref<1x4x256xf32, #tpu.memory_space<vmem>>, vector<1x4x256xf32>
    %1 = vector.shape_cast %0 : vector<1x4x256xf32> to vector<4x256xf32>
    %c0_2 = arith.constant 0 : index
    %c0_3 = arith.constant 0 : index
    %2 = vector.load %arg2[%c0_2, %c0_3] : memref<2x4xf32, #tpu.memory_space<vmem>>, vector<2x4xf32>
    %cst = arith.constant dense<0.000000e+00> : vector<2x256xf32>
    %3 = tpu.matmul %2, %1, %cst {dimension_numbers = #tpu.dot_dimension_numbers<[1], [0], [0], [1], [0, 0, 1, 1], [], []>} : vector<2x4xf32>, vector<4x256xf32>, vector<2x256xf32> -> vector<2x256xf32>
    %c0_4 = arith.constant 0 : index
    %c0_5 = arith.constant 0 : index
    %4 = vector.load %arg3[%c0_4, %c0_5] : memref<2x1xf32, #tpu.memory_space<vmem>>, vector<2x1xf32>
    %5 = vector.broadcast %4 : vector<2x1xf32> to vector<2x256xf32>
    %6 = arith.addf %3, %5 : vector<2x256xf32>
    %7 = arith.negf %6 : vector<2x256xf32>
    %8 = math.exp %7 : vector<2x256xf32>
    %cst_6 = arith.constant 1.000000e+00 : f32
    %9 = vector.broadcast %cst_6 : f32 to vector<2x256xf32>
    %10 = arith.addf %9, %8 : vector<2x256xf32>
    %11 = arith.divf %9, %10 : vector<2x256xf32>
    %12 = arith.mulf %6, %11 : vector<2x256xf32>
    %13 = tpu.iota {dimensions = array<i32: 1>} : vector<2x256xi32>
    %c16_i32 = arith.constant 16 : i32
    %c0_i32 = arith.constant 0 : i32
    %14 = arith.cmpi eq, %c16_i32, %c0_i32 : i32
    %c1_i32 = arith.constant 1 : i32
    %15 = arith.select %14, %c1_i32, %c16_i32 : i32
    %16 = vector.broadcast %15 : i32 to vector<2x256xi32>
    %17 = arith.remsi %13, %16 : vector<2x256xi32>
    %c0_i32_7 = arith.constant 0 : i32
    %18 = vector.broadcast %c0_i32_7 : i32 to vector<2x256xi32>
    %19 = arith.cmpi ne, %17, %18 : vector<2x256xi32>
    %c0_i32_8 = arith.constant 0 : i32
    %20 = vector.broadcast %c0_i32_8 : i32 to vector<2x256xi32>
    %21 = arith.cmpi slt, %17, %20 : vector<2x256xi32>
    %c0_i32_9 = arith.constant 0 : i32
    %22 = arith.cmpi slt, %15, %c0_i32_9 : i32
    %23 = vector.broadcast %22 : i1 to vector<2x256xi1>
    %24 = vector.broadcast %23 : vector<2x256xi1> to vector<2x256xi1>
    %25 = arith.xori %21, %24 : vector<2x256xi1>
    %26 = arith.andi %25, %19 : vector<2x256xi1>
    %27 = vector.broadcast %15 : i32 to vector<2x256xi32>
    %28 = arith.addi %17, %27 : vector<2x256xi32>
    %29 = arith.select %26, %28, %17 : vector<2x256xi1>, vector<2x256xi32>
    %c15_i32 = arith.constant 15 : i32
    %30 = vector.broadcast %c15_i32 : i32 to vector<2x256xi32>
    %31 = arith.cmpi slt, %29, %30 : vector<2x256xi32>
    %c14_i32 = arith.constant 14 : i32
    %32 = vector.broadcast %c14_i32 : i32 to vector<2x256xi32>
    %33 = arith.cmpi slt, %29, %32 : vector<2x256xi32>
    %c1_i32_10 = arith.constant 1 : i32
    %34 = vector.broadcast %c1_i32_10 : i32 to vector<2x256xi32>
    %35 = arith.cmpi sge, %29, %34 : vector<2x256xi32>
    %c2_i32 = arith.constant 2 : i32
    %36 = vector.broadcast %c2_i32 : i32 to vector<2x256xi32>
    %37 = arith.cmpi sge, %29, %36 : vector<2x256xi32>
    %cst_11 = arith.constant 0xFF800000 : f32
    %38 = vector.broadcast %cst_11 : f32 to vector<2x1xf32>
    %cst_12 = arith.constant 0xFF800000 : f32
    %39 = vector.broadcast %cst_12 : f32 to vector<2x2xf32>
    %cst_13 = arith.constant 0xFF800000 : f32
    %40 = vector.broadcast %cst_13 : f32 to vector<2x16xf32>
    %cst_14 = arith.constant 0xFF800000 : f32
    %41 = vector.broadcast %cst_14 : f32 to vector<2x32xf32>
    %c0_15 = arith.constant 0 : index
    %c0_16 = arith.constant 0 : index
    %c0_17 = arith.constant 0 : index
    %42 = vector.load %arg4[%c0_15, %c0_16, %c0_17] : memref<4x8x2xf32, #tpu.memory_space<vmem>>, vector<1x8x2xf32>
    %43 = vector.shape_cast %42 : vector<1x8x2xf32> to vector<8x2xf32>
    %cst_18 = arith.constant dense<0.000000e+00> : vector<8x256xf32>
    %44 = tpu.matmul %43, %12, %cst_18 {dimension_numbers = #tpu.dot_dimension_numbers<[1], [0], [0], [1], [0, 0, 1, 1], [], []>} : vector<8x2xf32>, vector<2x256xf32>, vector<8x256xf32> -> vector<8x256xf32>
    %45 = vector.extract_strided_slice %12 {offsets = [0, 1], sizes = [2, 255], strides = [1, 1]} : vector<2x256xf32> to vector<2x255xf32>
    %46 = tpu.concatenate %45, %38 in 1 : vector<2x255xf32>, vector<2x1xf32> -> vector<2x256xf32>
    %cst_19 = arith.constant 0xFF800000 : f32
    %47 = vector.broadcast %cst_19 : f32 to vector<2x256xf32>
    %48 = arith.select %31, %46, %47 : vector<2x256xi1>, vector<2x256xf32>
    %49 = arith.maximumf %12, %48 : vector<2x256xf32>
    %50 = vector.extract_strided_slice %12 {offsets = [0, 0], sizes = [2, 255], strides = [1, 1]} : vector<2x256xf32> to vector<2x255xf32>
    %51 = tpu.concatenate %38, %50 in 1 : vector<2x1xf32>, vector<2x255xf32> -> vector<2x256xf32>
    %cst_20 = arith.constant 0xFF800000 : f32
    %52 = vector.broadcast %cst_20 : f32 to vector<2x256xf32>
    %53 = arith.select %35, %51, %52 : vector<2x256xi1>, vector<2x256xf32>
    %54 = arith.maximumf %49, %53 : vector<2x256xf32>
    %55 = vector.extract_strided_slice %12 {offsets = [0, 2], sizes = [2, 254], strides = [1, 1]} : vector<2x256xf32> to vector<2x254xf32>
    %56 = tpu.concatenate %55, %39 in 1 : vector<2x254xf32>, vector<2x2xf32> -> vector<2x256xf32>
    %cst_21 = arith.constant 0xFF800000 : f32
    %57 = vector.broadcast %cst_21 : f32 to vector<2x256xf32>
    %58 = arith.select %33, %56, %57 : vector<2x256xi1>, vector<2x256xf32>
    %59 = arith.maximumf %54, %58 : vector<2x256xf32>
    %60 = vector.extract_strided_slice %12 {offsets = [0, 0], sizes = [2, 254], strides = [1, 1]} : vector<2x256xf32> to vector<2x254xf32>
    %61 = tpu.concatenate %39, %60 in 1 : vector<2x2xf32>, vector<2x254xf32> -> vector<2x256xf32>
    %cst_22 = arith.constant 0xFF800000 : f32
    %62 = vector.broadcast %cst_22 : f32 to vector<2x256xf32>
    %63 = arith.select %37, %61, %62 : vector<2x256xi1>, vector<2x256xf32>
    %64 = arith.maximumf %59, %63 : vector<2x256xf32>
    %65 = vector.extract_strided_slice %64 {offsets = [0, 16], sizes = [2, 240], strides = [1, 1]} : vector<2x256xf32> to vector<2x240xf32>
    %66 = tpu.concatenate %65, %40 in 1 : vector<2x240xf32>, vector<2x16xf32> -> vector<2x256xf32>
    %67 = arith.maximumf %64, %66 : vector<2x256xf32>
    %68 = vector.extract_strided_slice %64 {offsets = [0, 0], sizes = [2, 240], strides = [1, 1]} : vector<2x256xf32> to vector<2x240xf32>
    %69 = tpu.concatenate %40, %68 in 1 : vector<2x16xf32>, vector<2x240xf32> -> vector<2x256xf32>
    %70 = arith.maximumf %67, %69 : vector<2x256xf32>
    %71 = vector.extract_strided_slice %64 {offsets = [0, 32], sizes = [2, 224], strides = [1, 1]} : vector<2x256xf32> to vector<2x224xf32>
    %72 = tpu.concatenate %71, %41 in 1 : vector<2x224xf32>, vector<2x32xf32> -> vector<2x256xf32>
    %73 = arith.maximumf %70, %72 : vector<2x256xf32>
    %74 = vector.extract_strided_slice %64 {offsets = [0, 0], sizes = [2, 224], strides = [1, 1]} : vector<2x256xf32> to vector<2x224xf32>
    %75 = tpu.concatenate %41, %74 in 1 : vector<2x32xf32>, vector<2x224xf32> -> vector<2x256xf32>
    %76 = arith.maximumf %73, %75 : vector<2x256xf32>
    %c1 = arith.constant 1 : index
    %c0_23 = arith.constant 0 : index
    %c0_24 = arith.constant 0 : index
    %77 = vector.load %arg4[%c1, %c0_23, %c0_24] : memref<4x8x2xf32, #tpu.memory_space<vmem>>, vector<1x8x2xf32>
    %78 = vector.shape_cast %77 : vector<1x8x2xf32> to vector<8x2xf32>
    %cst_25 = arith.constant dense<0.000000e+00> : vector<8x256xf32>
    %79 = tpu.matmul %78, %76, %cst_25 {dimension_numbers = #tpu.dot_dimension_numbers<[1], [0], [0], [1], [0, 0, 1, 1], [], []>} : vector<8x2xf32>, vector<2x256xf32>, vector<8x256xf32> -> vector<8x256xf32>
    %80 = arith.addf %44, %79 : vector<8x256xf32>
    %81 = vector.extract_strided_slice %76 {offsets = [0, 1], sizes = [2, 255], strides = [1, 1]} : vector<2x256xf32> to vector<2x255xf32>
    %82 = tpu.concatenate %81, %38 in 1 : vector<2x255xf32>, vector<2x1xf32> -> vector<2x256xf32>
    %cst_26 = arith.constant 0xFF800000 : f32
    %83 = vector.broadcast %cst_26 : f32 to vector<2x256xf32>
    %84 = arith.select %31, %82, %83 : vector<2x256xi1>, vector<2x256xf32>
    %85 = arith.maximumf %76, %84 : vector<2x256xf32>
    %86 = vector.extract_strided_slice %76 {offsets = [0, 0], sizes = [2, 255], strides = [1, 1]} : vector<2x256xf32> to vector<2x255xf32>
    %87 = tpu.concatenate %38, %86 in 1 : vector<2x1xf32>, vector<2x255xf32> -> vector<2x256xf32>
    %cst_27 = arith.constant 0xFF800000 : f32
    %88 = vector.broadcast %cst_27 : f32 to vector<2x256xf32>
    %89 = arith.select %35, %87, %88 : vector<2x256xi1>, vector<2x256xf32>
    %90 = arith.maximumf %85, %89 : vector<2x256xf32>
    %91 = vector.extract_strided_slice %76 {offsets = [0, 2], sizes = [2, 254], strides = [1, 1]} : vector<2x256xf32> to vector<2x254xf32>
    %92 = tpu.concatenate %91, %39 in 1 : vector<2x254xf32>, vector<2x2xf32> -> vector<2x256xf32>
    %cst_28 = arith.constant 0xFF800000 : f32
    %93 = vector.broadcast %cst_28 : f32 to vector<2x256xf32>
    %94 = arith.select %33, %92, %93 : vector<2x256xi1>, vector<2x256xf32>
    %95 = arith.maximumf %90, %94 : vector<2x256xf32>
    %96 = vector.extract_strided_slice %76 {offsets = [0, 0], sizes = [2, 254], strides = [1, 1]} : vector<2x256xf32> to vector<2x254xf32>
    %97 = tpu.concatenate %39, %96 in 1 : vector<2x2xf32>, vector<2x254xf32> -> vector<2x256xf32>
    %cst_29 = arith.constant 0xFF800000 : f32
    %98 = vector.broadcast %cst_29 : f32 to vector<2x256xf32>
    %99 = arith.select %37, %97, %98 : vector<2x256xi1>, vector<2x256xf32>
    %100 = arith.maximumf %95, %99 : vector<2x256xf32>
    %101 = vector.extract_strided_slice %100 {offsets = [0, 16], sizes = [2, 240], strides = [1, 1]} : vector<2x256xf32> to vector<2x240xf32>
    %102 = tpu.concatenate %101, %40 in 1 : vector<2x240xf32>, vector<2x16xf32> -> vector<2x256xf32>
    %103 = arith.maximumf %100, %102 : vector<2x256xf32>
    %104 = vector.extract_strided_slice %100 {offsets = [0, 0], sizes = [2, 240], strides = [1, 1]} : vector<2x256xf32> to vector<2x240xf32>
    %105 = tpu.concatenate %40, %104 in 1 : vector<2x16xf32>, vector<2x240xf32> -> vector<2x256xf32>
    %106 = arith.maximumf %103, %105 : vector<2x256xf32>
    %107 = vector.extract_strided_slice %100 {offsets = [0, 32], sizes = [2, 224], strides = [1, 1]} : vector<2x256xf32> to vector<2x224xf32>
    %108 = tpu.concatenate %107, %41 in 1 : vector<2x224xf32>, vector<2x32xf32> -> vector<2x256xf32>
    %109 = arith.maximumf %106, %108 : vector<2x256xf32>
    %110 = vector.extract_strided_slice %100 {offsets = [0, 0], sizes = [2, 224], strides = [1, 1]} : vector<2x256xf32> to vector<2x224xf32>
    %111 = tpu.concatenate %41, %110 in 1 : vector<2x32xf32>, vector<2x224xf32> -> vector<2x256xf32>
    %112 = arith.maximumf %109, %111 : vector<2x256xf32>
    %c2 = arith.constant 2 : index
    %c0_30 = arith.constant 0 : index
    %c0_31 = arith.constant 0 : index
    %113 = vector.load %arg4[%c2, %c0_30, %c0_31] : memref<4x8x2xf32, #tpu.memory_space<vmem>>, vector<1x8x2xf32>
    %114 = vector.shape_cast %113 : vector<1x8x2xf32> to vector<8x2xf32>
    %cst_32 = arith.constant dense<0.000000e+00> : vector<8x256xf32>
    %115 = tpu.matmul %114, %112, %cst_32 {dimension_numbers = #tpu.dot_dimension_numbers<[1], [0], [0], [1], [0, 0, 1, 1], [], []>} : vector<8x2xf32>, vector<2x256xf32>, vector<8x256xf32> -> vector<8x256xf32>
    %116 = arith.addf %80, %115 : vector<8x256xf32>
    %117 = vector.extract_strided_slice %112 {offsets = [0, 1], sizes = [2, 255], strides = [1, 1]} : vector<2x256xf32> to vector<2x255xf32>
    %118 = tpu.concatenate %117, %38 in 1 : vector<2x255xf32>, vector<2x1xf32> -> vector<2x256xf32>
    %cst_33 = arith.constant 0xFF800000 : f32
    %119 = vector.broadcast %cst_33 : f32 to vector<2x256xf32>
    %120 = arith.select %31, %118, %119 : vector<2x256xi1>, vector<2x256xf32>
    %121 = arith.maximumf %112, %120 : vector<2x256xf32>
    %122 = vector.extract_strided_slice %112 {offsets = [0, 0], sizes = [2, 255], strides = [1, 1]} : vector<2x256xf32> to vector<2x255xf32>
    %123 = tpu.concatenate %38, %122 in 1 : vector<2x1xf32>, vector<2x255xf32> -> vector<2x256xf32>
    %cst_34 = arith.constant 0xFF800000 : f32
    %124 = vector.broadcast %cst_34 : f32 to vector<2x256xf32>
    %125 = arith.select %35, %123, %124 : vector<2x256xi1>, vector<2x256xf32>
    %126 = arith.maximumf %121, %125 : vector<2x256xf32>
    %127 = vector.extract_strided_slice %112 {offsets = [0, 2], sizes = [2, 254], strides = [1, 1]} : vector<2x256xf32> to vector<2x254xf32>
    %128 = tpu.concatenate %127, %39 in 1 : vector<2x254xf32>, vector<2x2xf32> -> vector<2x256xf32>
    %cst_35 = arith.constant 0xFF800000 : f32
    %129 = vector.broadcast %cst_35 : f32 to vector<2x256xf32>
    %130 = arith.select %33, %128, %129 : vector<2x256xi1>, vector<2x256xf32>
    %131 = arith.maximumf %126, %130 : vector<2x256xf32>
    %132 = vector.extract_strided_slice %112 {offsets = [0, 0], sizes = [2, 254], strides = [1, 1]} : vector<2x256xf32> to vector<2x254xf32>
    %133 = tpu.concatenate %39, %132 in 1 : vector<2x2xf32>, vector<2x254xf32> -> vector<2x256xf32>
    %cst_36 = arith.constant 0xFF800000 : f32
    %134 = vector.broadcast %cst_36 : f32 to vector<2x256xf32>
    %135 = arith.select %37, %133, %134 : vector<2x256xi1>, vector<2x256xf32>
    %136 = arith.maximumf %131, %135 : vector<2x256xf32>
    %137 = vector.extract_strided_slice %136 {offsets = [0, 16], sizes = [2, 240], strides = [1, 1]} : vector<2x256xf32> to vector<2x240xf32>
    %138 = tpu.concatenate %137, %40 in 1 : vector<2x240xf32>, vector<2x16xf32> -> vector<2x256xf32>
    %139 = arith.maximumf %136, %138 : vector<2x256xf32>
    %140 = vector.extract_strided_slice %136 {offsets = [0, 0], sizes = [2, 240], strides = [1, 1]} : vector<2x256xf32> to vector<2x240xf32>
    %141 = tpu.concatenate %40, %140 in 1 : vector<2x16xf32>, vector<2x240xf32> -> vector<2x256xf32>
    %142 = arith.maximumf %139, %141 : vector<2x256xf32>
    %143 = vector.extract_strided_slice %136 {offsets = [0, 32], sizes = [2, 224], strides = [1, 1]} : vector<2x256xf32> to vector<2x224xf32>
    %144 = tpu.concatenate %143, %41 in 1 : vector<2x224xf32>, vector<2x32xf32> -> vector<2x256xf32>
    %145 = arith.maximumf %142, %144 : vector<2x256xf32>
    %146 = vector.extract_strided_slice %136 {offsets = [0, 0], sizes = [2, 224], strides = [1, 1]} : vector<2x256xf32> to vector<2x224xf32>
    %147 = tpu.concatenate %41, %146 in 1 : vector<2x32xf32>, vector<2x224xf32> -> vector<2x256xf32>
    %148 = arith.maximumf %145, %147 : vector<2x256xf32>
    %c3 = arith.constant 3 : index
    %c0_37 = arith.constant 0 : index
    %c0_38 = arith.constant 0 : index
    %149 = vector.load %arg4[%c3, %c0_37, %c0_38] : memref<4x8x2xf32, #tpu.memory_space<vmem>>, vector<1x8x2xf32>
    %150 = vector.shape_cast %149 : vector<1x8x2xf32> to vector<8x2xf32>
    %cst_39 = arith.constant dense<0.000000e+00> : vector<8x256xf32>
    %151 = tpu.matmul %150, %148, %cst_39 {dimension_numbers = #tpu.dot_dimension_numbers<[1], [0], [0], [1], [0, 0, 1, 1], [], []>} : vector<8x2xf32>, vector<2x256xf32>, vector<8x256xf32> -> vector<8x256xf32>
    %152 = arith.addf %116, %151 : vector<8x256xf32>
    %c0_40 = arith.constant 0 : index
    %c0_41 = arith.constant 0 : index
    %153 = vector.load %arg5[%c0_40, %c0_41] : memref<8x1xf32, #tpu.memory_space<vmem>>, vector<8x1xf32>
    %154 = vector.broadcast %153 : vector<8x1xf32> to vector<8x256xf32>
    %155 = arith.addf %152, %154 : vector<8x256xf32>
    %156 = arith.negf %155 : vector<8x256xf32>
    %157 = math.exp %156 : vector<8x256xf32>
    %cst_42 = arith.constant 1.000000e+00 : f32
    %158 = vector.broadcast %cst_42 : f32 to vector<8x256xf32>
    %159 = arith.addf %158, %157 : vector<8x256xf32>
    %160 = arith.divf %158, %159 : vector<8x256xf32>
    %161 = arith.mulf %155, %160 : vector<8x256xf32>
    %c0_43 = arith.constant 0 : index
    %c0_44 = arith.constant 0 : index
    %c0_45 = arith.constant 0 : index
    %162 = vector.load %arg6[%c0_43, %c0_44, %c0_45] : memref<1x8x256xf32, #tpu.memory_space<vmem>>, vector<1x8x256xf32>
    %163 = vector.shape_cast %162 : vector<1x8x256xf32> to vector<8x256xf32>
    %164 = vector.shape_cast %161 : vector<8x256xf32> to vector<1x8x256xf32>
    tpu.vector_store %arg6[%c0_43, %c0_44, %c0_45], %164 {strides = array<i32>} : memref<1x8x256xf32, #tpu.memory_space<vmem>>, vector<1x8x256xf32>,
    return
  }
  func.func @transform_0(%arg0: i32) -> (i32, i32, i32) {
    %c0_i32 = arith.constant 0 : i32
    %c0_i32_0 = arith.constant 0 : i32
    %c0_i32_1 = arith.constant 0 : i32
    return %arg0, %c0_i32, %c0_i32_0 : i32, i32, i32
  }
  func.func @transform_1(%arg0: i32) -> (i32, i32) {
    %c0_i32 = arith.constant 0 : i32
    %c0_i32_0 = arith.constant 0 : i32
    %c0_i32_1 = arith.constant 0 : i32
    return %c0_i32, %c0_i32_0 : i32, i32
  }
  func.func @transform_2(%arg0: i32) -> (i32, i32) {
    %c0_i32 = arith.constant 0 : i32
    %c0_i32_0 = arith.constant 0 : i32
    %c0_i32_1 = arith.constant 0 : i32
    return %c0_i32, %c0_i32_0 : i32, i32
  }
  func.func @transform_3(%arg0: i32) -> (i32, i32, i32) {
    %c0_i32 = arith.constant 0 : i32
    %c0_i32_0 = arith.constant 0 : i32
    %c0_i32_1 = arith.constant 0 : i32
    %c0_i32_2 = arith.constant 0 : i32
    return %c0_i32, %c0_i32_0, %c0_i32_1 : i32, i32, i32
  }
  func.func @transform_4(%arg0: i32) -> (i32, i32) {
    %c0_i32 = arith.constant 0 : i32
    %c0_i32_0 = arith.constant 0 : i32
    %c0_i32_1 = arith.constant 0 : i32
    return %c0_i32, %c0_i32_0 : i32, i32
  }
  func.func @transform_5(%arg0: i32) -> (i32, i32, i32) {
    %c0_i32 = arith.constant 0 : i32
    %c0_i32_0 = arith.constant 0 : i32
    %c0_i32_1 = arith.constant 0 : i32
    return %arg0, %c0_i32, %c0_i32_0 : i32, i32, i32
  }
}

</mosaic_0001>

<llo_original>
// kernel: spp_forward.1
$region0: #{spp_forward.1}
  #allocation0 [shape = 'u32[]', space=smem, size = 0x4, offset = 0x4, fixed_abs, tag = 'smem constant byte address 0x4 - core index']
  #allocation1 [shape = 'u32[144,128]{1,0:T(1,128)}', space=vmem, size = 0x12000, scoped, tag = 'internal scratch']
  %s0 = inlined_call_operand.vmem [shape: f32[2,4,256], index: 0, kind: input, shape index: {}]
  %s1 = inlined_call_operand.vmem [shape: f32[2,4], index: 1, kind: input, shape index: {}]
  %s2 = inlined_call_operand.vmem [shape: f32[2,1], index: 2, kind: input, shape index: {}]
  %s3 = inlined_call_operand.vmem [shape: f32[4,8,2], index: 3, kind: input, shape index: {}]
  %s4 = inlined_call_operand.vmem [shape: f32[8,1], index: 4, kind: input, shape index: {}]
  %s5 = inlined_call_operand.vmem [shape: f32[2,8,256], index: 5, kind: output, shape index: {}]
  %s6 = sld [smem:[#allocation0]]
  $region53: #{spp_forward.1} parent=0
    _
  %s8 = ssub.s32 1, %s6
  %s9 = scalar_select 0, %s8, %s6
  loop: start=0, step=1, limit=4
  $region2: #{spp_forward.1} parent=0 // loop_pre_header
    _
  $region3: #{spp_forward.1} parent=0 // loop_header
    %s11 = sphi 0, %s15
    %p12 = scmp.ge.s32.totalorder %s11, 4
    %s21 = sphi 0, %s23
    %s24 = sphi 0, %s21
    %s25 = sphi 0, %s24
    %s41 = sphi 0, %s25
    %s45 = sphi 0, %s45
    %s47 = sphi 0, %s45
    %s48 = sphi 0, %s47
    %s62 = sphi 0, %s48
    %s66 = sphi 0, %s66
    %s68 = sphi 0, %s66
    %s69 = sphi 0, %s68
    %s83 = sphi 0, %s69
    %s87 = sphi 0, %s87
    %s89 = sphi 0, %s87
    %s90 = sphi 0, %s89
    %s104 = sphi 0, %s90
    %s108 = sphi 0, %s108
    %s110 = sphi 0, %s108
    %s111 = sphi 0, %s110
    %s125 = sphi 0, %s111
    %s131 = sphi 0, %s133
    %s134 = sphi 0, %s131
    %s135 = sphi 0, %s134
    %s151 = sphi 0, %s135
  $region4: #{spp_forward.1} parent=0 // loop_header_branch
    %14 = sbr.rel (%p12) target = $region8
  $region5: #{spp_forward.1} parent=0 // loop_body
    %s16 = ssub.s32 %s11, 1
    %s17 = ssub.s32 %s11, 2
    %s18 = sadd.s32 %s11, 1
    %s19 = ssub.s32 %s11, %s18
    %p20 = scmp.eq.s32.totalorder %s19, 0
    %s22 = sadd.s32 %s21, 1
    %s23 = scalar_select %p20, %s21, %s22
    %p26 = pneg %p20
    %p27 = scmp.eq.s32.totalorder %s11, 1
    %p28 = por %p26, %p27
    %p29 = scmp.ne.s32.totalorder %s21, %s24
    %p30 = scmp.eq.s32.totalorder %s11, 0
    %p31 = por %p29, %p30
    %p32 = scmp.ne.s32.totalorder %s21, %s24
    %p33 = scmp.eq.s32.totalorder %s16, 1
    %p34 = por %p32, %p33
    %p35 = scmp.ne.s32.totalorder %s24, %s25
    %p36 = scmp.eq.s32.totalorder %s16, 0
    %p37 = por %p35, %p36
    %p38 = scmp.ne.s32.totalorder %s24, %s25
    %p39 = scmp.eq.s32.totalorder %s17, 1
    %p40 = por %p38, %p39
    %p42 = scmp.ne.s32.totalorder %s25, %s41
    %p43 = scmp.eq.s32.totalorder %s17, 0
    %p44 = por %p42, %p43
    %s46 = sadd.s32 %s45, 1
    %p49 = scmp.eq.s32.totalorder %s11, 1
    %p50 = scmp.ne.s32.totalorder %s45, %s47
    %p51 = scmp.eq.s32.totalorder %s11, 0
    %p52 = por %p50, %p51
    %p53 = scmp.ne.s32.totalorder %s45, %s47
    %p54 = scmp.eq.s32.totalorder %s16, 1
    %p55 = por %p53, %p54
    %p56 = scmp.ne.s32.totalorder %s47, %s48
    %p57 = scmp.eq.s32.totalorder %s16, 0
    %p58 = por %p56, %p57
    %p59 = scmp.ne.s32.totalorder %s47, %s48
    %p60 = scmp.eq.s32.totalorder %s17, 1
    %p61 = por %p59, %p60
    %p63 = scmp.ne.s32.totalorder %s48, %s62
    %p64 = scmp.eq.s32.totalorder %s17, 0
    %p65 = por %p63, %p64
    %s67 = sadd.s32 %s66, 1
    %p70 = scmp.eq.s32.totalorder %s11, 1
    %p71 = scmp.ne.s32.totalorder %s66, %s68
    %p72 = scmp.eq.s32.totalorder %s11, 0
    %p73 = por %p71, %p72
    %p74 = scmp.ne.s32.totalorder %s66, %s68
    %p75 = scmp.eq.s32.totalorder %s16, 1
    %p76 = por %p74, %p75
    %p77 = scmp.ne.s32.totalorder %s68, %s69
    %p78 = scmp.eq.s32.totalorder %s16, 0
    %p79 = por %p77, %p78
    %p80 = scmp.ne.s32.totalorder %s68, %s69
    %p81 = scmp.eq.s32.totalorder %s17, 1
    %p82 = por %p80, %p81
    %p84 = scmp.ne.s32.totalorder %s69, %s83
    %p85 = scmp.eq.s32.totalorder %s17, 0
    %p86 = por %p84, %p85
    %s88 = sadd.s32 %s87, 1
    %p91 = scmp.eq.s32.totalorder %s11, 1
    %p92 = scmp.ne.s32.totalorder %s87, %s89
    %p93 = scmp.eq.s32.totalorder %s11, 0
    %p94 = por %p92, %p93
    %p95 = scmp.ne.s32.totalorder %s87, %s89
    %p96 = scmp.eq.s32.totalorder %s16, 1
    %p97 = por %p95, %p96
    %p98 = scmp.ne.s32.totalorder %s89, %s90
    %p99 = scmp.eq.s32.totalorder %s16, 0
    %p100 = por %p98, %p99
    %p101 = scmp.ne.s32.totalorder %s89, %s90
    %p102 = scmp.eq.s32.totalorder %s17, 1
    %p103 = por %p101, %p102
    %p105 = scmp.ne.s32.totalorder %s90, %s104
    %p106 = scmp.eq.s32.totalorder %s17, 0
    %p107 = por %p105, %p106
    %s109 = sadd.s32 %s108, 1
    %p112 = scmp.eq.s32.totalorder %s11, 1
    %p113 = scmp.ne.s32.totalorder %s108, %s110
    %p114 = scmp.eq.s32.totalorder %s11, 0
    %p115 = por %p113, %p114
    %p116 = scmp.ne.s32.totalorder %s108, %s110
    %p117 = scmp.eq.s32.totalorder %s16, 1
    %p118 = por %p116, %p117
    %p119 = scmp.ne.s32.totalorder %s110, %s111
    %p120 = scmp.eq.s32.totalorder %s16, 0
    %p121 = por %p119, %p120
    %p122 = scmp.ne.s32.totalorder %s110, %s111
    %p123 = scmp.eq.s32.totalorder %s17, 1
    %p124 = por %p122, %p123
    %p126 = scmp.ne.s32.totalorder %s111, %s125
    %p127 = scmp.eq.s32.totalorder %s17, 0
    %p128 = por %p126, %p127
    %s129 = ssub.s32 %s11, %s18
    %p130 = scmp.eq.s32.totalorder %s129, 0
    %s132 = sadd.s32 %s131, 1
    %s133 = scalar_select %p130, %s131, %s132
    %p136 = pneg %p130
    %p137 = scmp.eq.s32.totalorder %s11, 1
    %p138 = por %p136, %p137
    %p139 = scmp.ne.s32.totalorder %s131, %s134
    %p140 = scmp.eq.s32.totalorder %s11, 0
    %p141 = por %p139, %p140
    %p142 = scmp.ne.s32.totalorder %s131, %s134
    %p143 = scmp.eq.s32.totalorder %s16, 1
    %p144 = por %p142, %p143
    %p145 = scmp.ne.s32.totalorder %s134, %s135
    %p146 = scmp.eq.s32.totalorder %s16, 0
    %p147 = por %p145, %p146
    %p148 = scmp.ne.s32.totalorder %s134, %s135
    %p149 = scmp.eq.s32.totalorder %s17, 1
    %p150 = por %p148, %p149
    %p152 = scmp.ne.s32.totalorder %s135, %s151
    %p153 = scmp.eq.s32.totalorder %s17, 0
    %p154 = por %p152, %p153
    %p155 = scmp.le.s32.totalorder 1, %s11
    %p156 = scmp.lt.s32.totalorder %s11, 3
    %p157 = pnand %p155, %p156
    %p158 = pneg %p157
    // Predicated region
    $region9: #{spp_forward.1} parent=5 // pred_check
      _
    $region10: #{spp_forward.1} parent=5 // pred_check_branch
      %160 = sbr.rel (%p157) target = $region12
    $region11: #{spp_forward.1} parent=5 // pred_region
      %s161 = ssub.s32 %s11, 1
      // Predicated region
      $region13: #{spp_forward.1} parent=11 // pred_check
        %p162 = pneg %p58
      $region14: #{spp_forward.1} parent=11 // pred_check_branch
        %164 = sbr.rel (%p162) target = $region16
      $region15: #{spp_forward.1} parent=11 // pred_region
        _
      $region16: #{spp_forward.1} parent=11 // pred_fallthru
        _
      // Predicated region
      $region17: #{spp_forward.1} parent=11 // pred_check
        %p165 = pneg %p79
      $region18: #{spp_forward.1} parent=11 // pred_check_branch
        %167 = sbr.rel (%p165) target = $region20
      $region19: #{spp_forward.1} parent=11 // pred_region
        _
      $region20: #{spp_forward.1} parent=11 // pred_fallthru
        _
      // Predicated region
      $region21: #{spp_forward.1} parent=11 // pred_check
        %p168 = pneg %p100
      $region22: #{spp_forward.1} parent=11 // pred_check_branch
        %170 = sbr.rel (%p168) target = $region24
      $region23: #{spp_forward.1} parent=11 // pred_region
        _
      $region24: #{spp_forward.1} parent=11 // pred_fallthru
        _
      // Predicated region
      $region25: #{spp_forward.1} parent=11 // pred_check
        %p171 = pneg %p121
      $region26: #{spp_forward.1} parent=11 // pred_check_branch
        %173 = sbr.rel (%p171) target = $region28
      $region27: #{spp_forward.1} parent=11 // pred_region
        _
      $region28: #{spp_forward.1} parent=11 // pred_fallthru
        _
    $region12: #{spp_forward.1} parent=5 // pred_fallthru
      _
    %p174 = scmp.lt.s32.totalorder %s11, 2
    // Predicated region
    $region29: #{spp_forward.1} parent=5 // pred_check
      %p175 = pneg %p174
    $region30: #{spp_forward.1} parent=5 // pred_check_branch
      %177 = sbr.rel (%p175) target = $region32
    $region31: #{spp_forward.1} parent=5 // pred_region
      // Predicated region
      $region33: #{spp_forward.1} parent=31 // pred_check
        %p178 = pneg %p31
      $region34: #{spp_forward.1} parent=31 // pred_check_branch
        %180 = sbr.rel (%p178) target = $region36
      $region35: #{spp_forward.1} parent=31 // pred_region
        %p181 = scmp.lt.s32.totalorder %s11, 1
        %s182 = scalar_select %p181, %s11, 1
        %s183 = smul.addr %s182, 2
        %s184 = smul.addr %s183, 4
        %s185 = scalar_lea.vmem %s0, %s184
      $region36: #{spp_forward.1} parent=31 // pred_fallthru
        _
    $region32: #{spp_forward.1} parent=5 // pred_fallthru
      _
    %p186 = scmp.le.s32.totalorder 1, %s11
    %p187 = scmp.lt.s32.totalorder %s11, 3
    %p188 = pnand %p186, %p187
    %p189 = pneg %p188
    // Predicated region
    $region37: #{spp_forward.1} parent=5 // pred_check
      _
    $region38: #{spp_forward.1} parent=5 // pred_check_branch
      %191 = sbr.rel (%p188) target = $region40
    $region39: #{spp_forward.1} parent=5 // pred_region
      %s192 = ssub.s32 %s11, 1
      %p193 = scmp.lt.s32.totalorder %s16, 1
      %s194 = scalar_select %p193, %s16, 1
      %s195 = smul.addr %s194, 2
      %s196 = smul.addr %s195, 4
      %s197 = scalar_lea.vmem %s0, %s196
      %p198 = pneg %p37
      %p199 = pneg %p34
      %p200 = pneg %p58
      %p201 = pneg %p55
      %p202 = pneg %p79
      %p203 = pneg %p76
      %p204 = pneg %p100
      %p205 = pneg %p97
      %p206 = pneg %p121
      %p207 = pneg %p118
      %p208 = pneg %p147
      %p209 = pneg %p144
      %p210 = scmp.lt.s32.totalorder %s16, 1
      %s211 = scalar_select %p210, %s16, 1
      %s212 = smul.addr %s211, 2
      %s213 = smul.addr %s212, 8
      %s214 = scalar_lea.vmem %s5, %s213
      %p215 = scmp.lt.s32.totalorder %s16, 1
      %s216 = scalar_select %p215, %s16, 1
      %s217 = smul.addr %s216, 2
      %s218 = smul.addr %s217, 4
      %s219 = scalar_lea.vmem %s0, %s218
      %p220 = scmp.lt.s32.totalorder %s16, 1
      %s221 = scalar_select %p220, %s16, 1
      %s222 = smul.addr %s221, 2
      %s223 = smul.addr %s222, 8
      %s224 = scalar_lea.vmem %s5, %s223
      %v225 = vld [vmem:[%s219] sm:$0xff]
      %v226 = vld [vmem:[%s1] sm:$0x3]
      %v227 = vld [vmem:[%s2] sm:$0x3]
      %229 = vset.pattern.permute.xlu0 0
      %230 = vperm.xlu0 %229, %v227
      %v231 = vpop.permute.xlu0 %230
      %v234 = vcombine.high %v225, %v225
      %vm235 = vcmask 31744
      %v237 = vsel %vm235, %v226, 0
      %vm239 = vcmask 1043456
      %v240 = vsel %vm239, %v225, 0
      %v242 = vsel %vm239, %v234, 0
      %244 = vmatprep.subr.mxu0 %v242
      %245 = vmatpush1.msra.mxu0 %v240
      %246 = vmatprep.subr.mxu0 0.0
      %247 = vmatpush1.msra.mxu0 0.0
      %248 = vmatprep.subr.mxu0 0.0
      %249 = vmatpush1.msra.mxu0 0.0
      %250 = vmatprep.subr.mxu0 0.0
      %251 = vmatpush1.msra.mxu0 0.0
      %252 = vmatprep.subr.mxu0 0.0
      %253 = vmatpush1.msra.mxu0 0.0
      %254 = vmatprep.subr.mxu0 0.0
      %255 = vmatpush1.msra.mxu0 0.0
      %256 = vmatprep.subr.mxu0 0.0
      %257 = vmatpush1.msra.mxu0 0.0
      %258 = vmatprep.subr.mxu0 0.0
      %259 = vmatpush1.msra.mxu0 0.0
      %260 = vmatprep.subr.mxu0 0.0
      %261 = vmatpush1.msra.mxu0 0.0
      %262 = vmatprep.subr.mxu0 0.0
      %263 = vmatpush1.msra.mxu0 0.0
      %264 = vmatprep.subr.mxu0 0.0
      %265 = vmatpush1.msra.mxu0 0.0
      %266 = vmatprep.subr.mxu0 0.0
      %267 = vmatpush1.msra.mxu0 0.0
      %268 = vmatprep.subr.mxu0 0.0
      %269 = vmatpush1.msra.mxu0 0.0
      %270 = vmatprep.subr.mxu0 0.0
      %271 = vmatpush1.msra.mxu0 0.0
      %272 = vmatprep.subr.mxu0 0.0
      %273 = vmatpush1.msra.mxu0 0.0
      %274 = vmatprep.subr.mxu0 0.0
      %275 = vmatpush1.msra.mxu0 0.0
      %276 = vmatprep.subr.mxu0 0.0
      %277 = vmatpush1.msra.mxu0 0.0
      %278 = vmatprep.subr.mxu0 0.0
      %279 = vmatpush1.msra.mxu0 0.0
      %280 = vmatprep.subr.mxu0 0.0
      %281 = vmatpush1.msra.mxu0 0.0
      %282 = vmatprep.subr.mxu0 0.0
      %283 = vmatpush1.msra.mxu0 0.0
      %284 = vmatprep.subr.mxu0 0.0
      %285 = vmatpush1.msra.mxu0 0.0
      %286 = vmatprep.subr.mxu0 0.0
      %287 = vmatpush1.msra.mxu0 0.0
      %288 = vmatprep.subr.mxu0 0.0
      %289 = vmatpush1.msra.mxu0 0.0
      %290 = vmatprep.subr.mxu0 0.0
      %291 = vmatpush1.msra.mxu0 0.0
      %292 = vmatprep.subr.mxu0 0.0
      %293 = vmatpush1.msra.mxu0 0.0
      %294 = vmatprep.subr.mxu0 0.0
      %295 = vmatpush1.msra.mxu0 0.0
      %296 = vmatprep.subr.mxu0 0.0
      %297 = vmatpush1.msra.mxu0 0.0
      %298 = vmatprep.subr.mxu0 0.0
      %299 = vmatpush1.msra.mxu0 0.0
      %300 = vmatprep.subr.mxu0 0.0
      %301 = vmatpush1.msra.mxu0 0.0
      %302 = vmatprep.subr.mxu0 0.0
      %303 = vmatpush1.msra.mxu0 0.0
      %304 = vmatprep.subr.mxu0 0.0
      %305 = vmatpush1.msra.mxu0 0.0
      %306 = vmatprep.subr.mxu0 0.0
      %307 = vmatpush1.msra.mxu0 0.0
      %308 = vmatprep.mubr.f32.mxu0 0.0
      %309 = vmatmul.mubr.f32.gmra.mrb[0].mxu0 %v237
      %v310 = vpop.f32.mrb[0].mxu0
      %v311 = vadd.f32 %v231, %v310
      %v312 = vpop.f32.mrb[0].mxu0
      %v313 = vadd.f32 %v231, %v312
      %314 = vdwg.mxu0
      %v315 = vxor.u32 %v311, 2147483648
      %v316 = vxor.u32 %v313, 2147483648
      %v317 = vmul.f32 %v315, 1.442695
      %v318 = vpow.pop %v317
      %v319 = vmul.f32 %v316, 1.442695
      %v320 = vpow.pop %v319
      %v321 = vadd.f32 %v318, 1.0
      %v322 = vadd.f32 %v320, 1.0
      %v323 = vrcp.pop %v321
      %v324 = vmul.f32 1.0, %v323
      %v325 = vrcp.pop %v322
      %v326 = vmul.f32 1.0, %v325
      %v327 = vmul.f32 %v311, %v324
      %v328 = vmul.f32 %v313, %v326
      %v329 = vlaneseq
      %v330 = vand.u32 %v329, 127
      %v331 = vadd.s32 %v330, 128
      %vm332 = vcmp.lt.s32.totalorder %v330, 0
      %v333 = vsub.s32 0, %v330
      %v334 = vsel %vm332, %v333, %v330
      %v335 = vshrl.u32 %v334, 4
      %v336 = vand.u32 %v334, 15
      %v337 = vsub.s32 0, %v336
      %v338 = vsel %vm332, %v337, %v336
      %vm339 = vcmp.lt.s32.totalorder %v331, 0
      %v340 = vsub.s32 0, %v331
      %v341 = vsel %vm339, %v340, %v331
      %v342 = vshrl.u32 %v341, 4
      %v343 = vand.u32 %v341, 15
      %v344 = vsub.s32 0, %v343
      %v345 = vsel %vm339, %v344, %v343
      %vm346 = vcmp.ne.s32.totalorder %v338, 0
      %vm347 = vcmp.ne.s32.totalorder %v345, 0
      %vm348 = vcmp.lt.s32.totalorder %v338, 0
      %vm349 = vcmp.lt.s32.totalorder %v345, 0
      %vm350 = vmand %vm348, %vm346
      %vm351 = vmand %vm349, %vm347
      %v352 = vadd.s32 %v338, 16
      %v353 = vadd.s32 %v345, 16
      %v354 = vsel %vm350, %v352, %v338
      %v355 = vsel %vm351, %v353, %v345
      %vm356 = vcmp.lt.s32.totalorder %v354, 15
      %vm357 = vcmp.lt.s32.totalorder %v355, 15
      %vm358 = vcmp.lt.s32.totalorder %v354, 14
      %vm359 = vcmp.lt.s32.totalorder %v355, 14
      %vm360 = vcmp.ge.s32.totalorder %v354, 1
      %vm361 = vcmp.ge.s32.totalorder %v355, 1
      %vm362 = vcmp.ge.s32.totalorder %v354, 2
      %vm363 = vcmp.ge.s32.totalorder %v355, 2
      %v364 = vld [vmem:[%s3] sm:$0xff]
      %367 = vrot.lane.b32.xlu0 %v327, 127
      %v368 = vpop.permute.xlu0 %367
      %369 = vrot.lane.b32.xlu0 %v328, 127
      %v370 = vpop.permute.xlu0 %369
      %vm371 = vcmask 1039360
      %v372 = vsel %vm371, %v368, %v370
      %v375 = vsel %vm371, %v370, -inf
      %v376 = vsel %vm356, %v372, -inf
      %v377 = vsel %vm357, %v375, -inf
      %v378 = vmax.f32 %v327, %v376
      %v379 = vmax.f32 %v328, %v377
      %380 = vrot.lane.b32.xlu0 %v327, 1
      %v381 = vpop.permute.xlu0 %380
      %382 = vrot.lane.b32.xlu0 %v328, 1
      %v383 = vpop.permute.xlu0 %382
      %vm384 = vcmask 7168
      %v385 = vsel %vm384, %v381, %v383
      %v388 = vsel %vm384, -inf, %v381
      %v389 = vsel %vm360, %v388, -inf
      %v390 = vsel %vm361, %v385, -inf
      %v391 = vmax.f32 %v378, %v389
      %v392 = vmax.f32 %v379, %v390
      %393 = vrot.lane.b32.xlu0 %v327, 126
      %v394 = vpop.permute.xlu0 %393
      %395 = vrot.lane.b32.xlu0 %v328, 126
      %v396 = vpop.permute.xlu0 %395
      %vm397 = vcmask 1031168
      %v398 = vsel %vm397, %v394, %v396
      %v401 = vsel %vm397, %v396, -inf
      %v402 = vsel %vm358, %v398, -inf
      %v403 = vsel %vm359, %v401, -inf
      %v404 = vmax.f32 %v391, %v402
      %v405 = vmax.f32 %v392, %v403
      %406 = vrot.lane.b32.xlu0 %v327, 2
      %v407 = vpop.permute.xlu0 %406
      %408 = vrot.lane.b32.xlu0 %v328, 2
      %v409 = vpop.permute.xlu0 %408
      %vm410 = vcmask 15360
      %v411 = vsel %vm410, %v407, %v409
      %v414 = vsel %vm410, -inf, %v407
      %v415 = vsel %vm362, %v414, -inf
      %v416 = vsel %vm363, %v411, -inf
      %v417 = vmax.f32 %v404, %v415
      %v418 = vmax.f32 %v405, %v416
      %421 = vrot.lane.b32.xlu0 %v417, 112
      %v422 = vpop.permute.xlu0 %421
      %423 = vrot.lane.b32.xlu0 %v418, 112
      %v424 = vpop.permute.xlu0 %423
      %vm425 = vcmask 916480
      %v426 = vsel %vm425, %v422, %v424
      %v429 = vsel %vm425, %v424, -inf
      %v430 = vmax.f32 %v417, %v426
      %v431 = vmax.f32 %v418, %v429
      %432 = vrot.lane.b32.xlu0 %v417, 16
      %v433 = vpop.permute.xlu0 %432
      %434 = vrot.lane.b32.xlu0 %v418, 16
      %v435 = vpop.permute.xlu0 %434
      %vm436 = vcmask 130048
      %v437 = vsel %vm436, %v433, %v435
      %v440 = vsel %vm436, -inf, %v433
      %v441 = vmax.f32 %v430, %v440
      %v442 = vmax.f32 %v431, %v437
      %443 = vrot.lane.b32.xlu0 %v417, 96
      %v444 = vpop.permute.xlu0 %443
      %445 = vrot.lane.b32.xlu0 %v418, 96
      %v446 = vpop.permute.xlu0 %445
      %vm447 = vcmask 785408
      %v448 = vsel %vm447, %v444, %v446
      %v451 = vsel %vm447, %v446, -inf
      %v452 = vmax.f32 %v441, %v448
      %v453 = vmax.f32 %v442, %v451
      %454 = vrot.lane.b32.xlu0 %v417, 32
      %v455 = vpop.permute.xlu0 %454
      %456 = vrot.lane.b32.xlu0 %v418, 32
      %v457 = vpop.permute.xlu0 %456
      %vm458 = vcmask 261120
      %v459 = vsel %vm458, %v455, %v457
      %v462 = vsel %vm458, -inf, %v455
      %v463 = vmax.f32 %v452, %v462
      %v464 = vmax.f32 %v453, %v459
      %s465 = scalar_lea.vmem %s3, 8
      %v466 = vld [vmem:[%s465] sm:$0xff]
      %v468 = vsel %vm410, %v466, 0
      %vm470 = vcmask 1041408
      %v472 = vsel %vm470, %v463, 0
      %v475 = vsel %vm470, %v464, 0
      %477 = vmatprep.subr.mxu0 %v475
      %478 = vmatpush1.msra.mxu0 %v472
      %479 = vmatprep.subr.mxu0 0.0
      %480 = vmatpush1.msra.mxu0 0.0
      %481 = vmatprep.subr.mxu0 0.0
      %482 = vmatpush1.msra.mxu0 0.0
      %483 = vmatprep.subr.mxu0 0.0
      %484 = vmatpush1.msra.mxu0 0.0
      %485 = vmatprep.subr.mxu0 0.0
      %486 = vmatpush1.msra.mxu0 0.0
      %487 = vmatprep.subr.mxu0 0.0
      %488 = vmatpush1.msra.mxu0 0.0
      %489 = vmatprep.subr.mxu0 0.0
      %490 = vmatpush1.msra.mxu0 0.0
      %491 = vmatprep.subr.mxu0 0.0
      %492 = vmatpush1.msra.mxu0 0.0
      %493 = vmatprep.subr.mxu0 0.0
      %494 = vmatpush1.msra.mxu0 0.0
      %495 = vmatprep.subr.mxu0 0.0
      %496 = vmatpush1.msra.mxu0 0.0
      %497 = vmatprep.subr.mxu0 0.0
      %498 = vmatpush1.msra.mxu0 0.0
      %499 = vmatprep.subr.mxu0 0.0
      %500 = vmatpush1.msra.mxu0 0.0
      %501 = vmatprep.subr.mxu0 0.0
      %502 = vmatpush1.msra.mxu0 0.0
      %503 = vmatprep.subr.mxu0 0.0
      %504 = vmatpush1.msra.mxu0 0.0
      %505 = vmatprep.subr.mxu0 0.0
      %506 = vmatpush1.msra.mxu0 0.0
      %507 = vmatprep.subr.mxu0 0.0
      %508 = vmatpush1.msra.mxu0 0.0
      %509 = vmatprep.subr.mxu0 0.0
      %510 = vmatpush1.msra.mxu0 0.0
      %511 = vmatprep.subr.mxu0 0.0
      %512 = vmatpush1.msra.mxu0 0.0
      %513 = vmatprep.subr.mxu0 0.0
      %514 = vmatpush1.msra.mxu0 0.0
      %515 = vmatprep.subr.mxu0 0.0
      %516 = vmatpush1.msra.mxu0 0.0
      %517 = vmatprep.subr.mxu0 0.0
      %518 = vmatpush1.msra.mxu0 0.0
      %519 = vmatprep.subr.mxu0 0.0
      %520 = vmatpush1.msra.mxu0 0.0
      %521 = vmatprep.subr.mxu0 0.0
      %522 = vmatpush1.msra.mxu0 0.0
      %523 = vmatprep.subr.mxu0 0.0
      %524 = vmatpush1.msra.mxu0 0.0
      %525 = vmatprep.subr.mxu0 0.0
      %526 = vmatpush1.msra.mxu0 0.0
      %527 = vmatprep.subr.mxu0 0.0
      %528 = vmatpush1.msra.mxu0 0.0
      %529 = vmatprep.subr.mxu0 0.0
      %530 = vmatpush1.msra.mxu0 0.0
      %531 = vmatprep.subr.mxu0 0.0
      %532 = vmatpush1.msra.mxu0 0.0
      %533 = vmatprep.subr.mxu0 0.0
      %534 = vmatpush1.msra.mxu0 0.0
      %535 = vmatprep.subr.mxu0 0.0
      %536 = vmatpush1.msra.mxu0 0.0
      %537 = vmatprep.subr.mxu0 0.0
      %538 = vmatpush1.msra.mxu0 0.0
      %539 = vmatprep.subr.mxu0 0.0
      %540 = vmatpush1.msra.mxu0 0.0
      %541 = vmatprep.mubr.f32.mxu0 0.0
      %542 = vmatmul.mubr.f32.gmra.mrb[0].mxu0 %v468
      %v543 = vpop.f32.mrb[0].mxu0
      %v544 = vadd.f32 0.0, %v543
      %v545 = vpop.f32.mrb[0].mxu0
      %v546 = vadd.f32 0.0, %v545
      %547 = vdwg.mxu0
      %v549 = vsel %vm410, %v364, 0
      %v551 = vsel %vm470, %v327, 0
      %v553 = vsel %vm470, %v328, 0
      %555 = vmatprep.subr.mxu0 %v553
      %556 = vmatpush1.msra.mxu0 %v551
      %557 = vmatprep.subr.mxu0 0.0
      %558 = vmatpush1.msra.mxu0 0.0
      %559 = vmatprep.subr.mxu0 0.0
      %560 = vmatpush1.msra.mxu0 0.0
      %561 = vmatprep.subr.mxu0 0.0
      %562 = vmatpush1.msra.mxu0 0.0
      %563 = vmatprep.subr.mxu0 0.0
      %564 = vmatpush1.msra.mxu0 0.0
      %565 = vmatprep.subr.mxu0 0.0
      %566 = vmatpush1.msra.mxu0 0.0
      %567 = vmatprep.subr.mxu0 0.0
      %568 = vmatpush1.msra.mxu0 0.0
      %569 = vmatprep.subr.mxu0 0.0
      %570 = vmatpush1.msra.mxu0 0.0
      %571 = vmatprep.subr.mxu0 0.0
      %572 = vmatpush1.msra.mxu0 0.0
      %573 = vmatprep.subr.mxu0 0.0
      %574 = vmatpush1.msra.mxu0 0.0
      %575 = vmatprep.subr.mxu0 0.0
      %576 = vmatpush1.msra.mxu0 0.0
      %577 = vmatprep.subr.mxu0 0.0
      %578 = vmatpush1.msra.mxu0 0.0
      %579 = vmatprep.subr.mxu0 0.0
      %580 = vmatpush1.msra.mxu0 0.0
      %581 = vmatprep.subr.mxu0 0.0
      %582 = vmatpush1.msra.mxu0 0.0
      %583 = vmatprep.subr.mxu0 0.0
      %584 = vmatpush1.msra.mxu0 0.0
      %585 = vmatprep.subr.mxu0 0.0
      %586 = vmatpush1.msra.mxu0 0.0
      %587 = vmatprep.subr.mxu0 0.0
      %588 = vmatpush1.msra.mxu0 0.0
      %589 = vmatprep.subr.mxu0 0.0
      %590 = vmatpush1.msra.mxu0 0.0
      %591 = vmatprep.subr.mxu0 0.0
      %592 = vmatpush1.msra.mxu0 0.0
      %593 = vmatprep.subr.mxu0 0.0
      %594 = vmatpush1.msra.mxu0 0.0
      %595 = vmatprep.subr.mxu0 0.0
      %596 = vmatpush1.msra.mxu0 0.0
      %597 = vmatprep.subr.mxu0 0.0
      %598 = vmatpush1.msra.mxu0 0.0
      %599 = vmatprep.subr.mxu0 0.0
      %600 = vmatpush1.msra.mxu0 0.0
      %601 = vmatprep.subr.mxu0 0.0
      %602 = vmatpush1.msra.mxu0 0.0
      %603 = vmatprep.subr.mxu0 0.0
      %604 = vmatpush1.msra.mxu0 0.0
      %605 = vmatprep.subr.mxu0 0.0
      %606 = vmatpush1.msra.mxu0 0.0
      %607 = vmatprep.subr.mxu0 0.0
      %608 = vmatpush1.msra.mxu0 0.0
      %609 = vmatprep.subr.mxu0 0.0
      %610 = vmatpush1.msra.mxu0 0.0
      %611 = vmatprep.subr.mxu0 0.0
      %612 = vmatpush1.msra.mxu0 0.0
      %613 = vmatprep.subr.mxu0 0.0
      %614 = vmatpush1.msra.mxu0 0.0
      %615 = vmatprep.subr.mxu0 0.0
      %616 = vmatpush1.msra.mxu0 0.0
      %617 = vmatprep.subr.mxu0 0.0
      %618 = vmatpush1.msra.mxu0 0.0
      %619 = vmatprep.mubr.f32.mxu0 0.0
      %620 = vmatmul.mubr.f32.gmra.mrb[0].mxu0 %v549
      %v621 = vpop.f32.mrb[0].mxu0
      %v622 = vadd.f32 %v544, %v621
      %v623 = vpop.f32.mrb[0].mxu0
      %v624 = vadd.f32 %v546, %v623
      %625 = vdwg.mxu0
      %626 = vrot.lane.b32.xlu0 %v463, 127
      %v627 = vpop.permute.xlu0 %626
      %628 = vrot.lane.b32.xlu0 %v464, 127
      %v629 = vpop.permute.xlu0 %628
      %v630 = vsel %vm371, %v627, %v629
      %v633 = vsel %vm371, %v629, -inf
      %v634 = vsel %vm356, %v630, -inf
      %v635 = vsel %vm357, %v633, -inf
      %v636 = vmax.f32 %v463, %v634
      %v637 = vmax.f32 %v464, %v635
      %638 = vrot.lane.b32.xlu0 %v463, 1
      %v639 = vpop.permute.xlu0 %638
      %640 = vrot.lane.b32.xlu0 %v464, 1
      %v641 = vpop.permute.xlu0 %640
      %v642 = vsel %vm384, %v639, %v641
      %v645 = vsel %vm384, -inf, %v639
      %v646 = vsel %vm360, %v645, -inf
      %v647 = vsel %vm361, %v642, -inf
      %v648 = vmax.f32 %v636, %v646
      %v649 = vmax.f32 %v637, %v647
      %650 = vrot.lane.b32.xlu0 %v463, 126
      %v651 = vpop.permute.xlu0 %650
      %652 = vrot.lane.b32.xlu0 %v464, 126
      %v653 = vpop.permute.xlu0 %652
      %v654 = vsel %vm397, %v651, %v653
      %v657 = vsel %vm397, %v653, -inf
      %v658 = vsel %vm358, %v654, -inf
      %v659 = vsel %vm359, %v657, -inf
      %v660 = vmax.f32 %v648, %v658
      %v661 = vmax.f32 %v649, %v659
      %662 = vrot.lane.b32.xlu0 %v463, 2
      %v663 = vpop.permute.xlu0 %662
      %664 = vrot.lane.b32.xlu0 %v464, 2
      %v665 = vpop.permute.xlu0 %664
      %v666 = vsel %vm410, %v663, %v665
      %v669 = vsel %vm410, -inf, %v663
      %v670 = vsel %vm362, %v669, -inf
      %v671 = vsel %vm363, %v666, -inf
      %v672 = vmax.f32 %v660, %v670
      %v673 = vmax.f32 %v661, %v671
      %676 = vrot.lane.b32.xlu0 %v672, 112
      %v677 = vpop.permute.xlu0 %676
      %678 = vrot.lane.b32.xlu0 %v673, 112
      %v679 = vpop.permute.xlu0 %678
      %v680 = vsel %vm425, %v677, %v679
      %v683 = vsel %vm425, %v679, -inf
      %v684 = vmax.f32 %v672, %v680
      %v685 = vmax.f32 %v673, %v683
      %686 = vrot.lane.b32.xlu0 %v672, 16
      %v687 = vpop.permute.xlu0 %686
      %688 = vrot.lane.b32.xlu0 %v673, 16
      %v689 = vpop.permute.xlu0 %688
      %v690 = vsel %vm436, %v687, %v689
      %v693 = vsel %vm436, -inf, %v687
      %v694 = vmax.f32 %v684, %v693
      %v695 = vmax.f32 %v685, %v690
      %696 = vrot.lane.b32.xlu0 %v672, 96
      %v697 = vpop.permute.xlu0 %696
      %698 = vrot.lane.b32.xlu0 %v673, 96
      %v699 = vpop.permute.xlu0 %698
      %v700 = vsel %vm447, %v697, %v699
      %v703 = vsel %vm447, %v699, -inf
      %v704 = vmax.f32 %v694, %v700
      %v705 = vmax.f32 %v695, %v703
      %706 = vrot.lane.b32.xlu0 %v672, 32
      %v707 = vpop.permute.xlu0 %706
      %708 = vrot.lane.b32.xlu0 %v673, 32
      %v709 = vpop.permute.xlu0 %708
      %v710 = vsel %vm458, %v707, %v709
      %v713 = vsel %vm458, -inf, %v707
      %v714 = vmax.f32 %v704, %v713
      %v715 = vmax.f32 %v705, %v710
      %s716 = scalar_lea.vmem %s3, 16
      %v717 = vld [vmem:[%s716] sm:$0xff]
      %v719 = vsel %vm410, %v717, 0
      %v722 = vsel %vm470, %v714, 0
      %v725 = vsel %vm470, %v715, 0
      %727 = vmatprep.subr.mxu0 %v725
      %728 = vmatpush1.msra.mxu0 %v722
      %729 = vmatprep.subr.mxu0 0.0
      %730 = vmatpush1.msra.mxu0 0.0
      %731 = vmatprep.subr.mxu0 0.0
      %732 = vmatpush1.msra.mxu0 0.0
      %733 = vmatprep.subr.mxu0 0.0
      %734 = vmatpush1.msra.mxu0 0.0
      %735 = vmatprep.subr.mxu0 0.0
      %736 = vmatpush1.msra.mxu0 0.0
      %737 = vmatprep.subr.mxu0 0.0
      %738 = vmatpush1.msra.mxu0 0.0
      %739 = vmatprep.subr.mxu0 0.0
      %740 = vmatpush1.msra.mxu0 0.0
      %741 = vmatprep.subr.mxu0 0.0
      %742 = vmatpush1.msra.mxu0 0.0
      %743 = vmatprep.subr.mxu0 0.0
      %744 = vmatpush1.msra.mxu0 0.0
      %745 = vmatprep.subr.mxu0 0.0
      %746 = vmatpush1.msra.mxu0 0.0
      %747 = vmatprep.subr.mxu0 0.0
      %748 = vmatpush1.msra.mxu0 0.0
      %749 = vmatprep.subr.mxu0 0.0
      %750 = vmatpush1.msra.mxu0 0.0
      %751 = vmatprep.subr.mxu0 0.0
      %752 = vmatpush1.msra.mxu0 0.0
      %753 = vmatprep.subr.mxu0 0.0
      %754 = vmatpush1.msra.mxu0 0.0
      %755 = vmatprep.subr.mxu0 0.0
      %756 = vmatpush1.msra.mxu0 0.0
      %757 = vmatprep.subr.mxu0 0.0
      %758 = vmatpush1.msra.mxu0 0.0
      %759 = vmatprep.subr.mxu0 0.0
      %760 = vmatpush1.msra.mxu0 0.0
      %761 = vmatprep.subr.mxu0 0.0
      %762 = vmatpush1.msra.mxu0 0.0
      %763 = vmatprep.subr.mxu0 0.0
      %764 = vmatpush1.msra.mxu0 0.0
      %765 = vmatprep.subr.mxu0 0.0
      %766 = vmatpush1.msra.mxu0 0.0
      %767 = vmatprep.subr.mxu0 0.0
      %768 = vmatpush1.msra.mxu0 0.0
      %769 = vmatprep.subr.mxu0 0.0
      %770 = vmatpush1.msra.mxu0 0.0
      %771 = vmatprep.subr.mxu0 0.0
      %772 = vmatpush1.msra.mxu0 0.0
      %773 = vmatprep.subr.mxu0 0.0
      %774 = vmatpush1.msra.mxu0 0.0
      %775 = vmatprep.subr.mxu0 0.0
      %776 = vmatpush1.msra.mxu0 0.0
      %777 = vmatprep.subr.mxu0 0.0
      %778 = vmatpush1.msra.mxu0 0.0
      %779 = vmatprep.subr.mxu0 0.0
      %780 = vmatpush1.msra.mxu0 0.0
      %781 = vmatprep.subr.mxu0 0.0
      %782 = vmatpush1.msra.mxu0 0.0
      %783 = vmatprep.subr.mxu0 0.0
      %784 = vmatpush1.msra.mxu0 0.0
      %785 = vmatprep.subr.mxu0 0.0
      %786 = vmatpush1.msra.mxu0 0.0
      %787 = vmatprep.subr.mxu0 0.0
      %788 = vmatpush1.msra.mxu0 0.0
      %789 = vmatprep.subr.mxu0 0.0
      %790 = vmatpush1.msra.mxu0 0.0
      %791 = vmatprep.mubr.f32.mxu0 0.0
      %792 = vmatmul.mubr.f32.gmra.mrb[0].mxu0 %v719
      %v793 = vpop.f32.mrb[0].mxu0
      %v794 = vadd.f32 0.0, %v793
      %v795 = vpop.f32.mrb[0].mxu0
      %v796 = vadd.f32 0.0, %v795
      %797 = vdwg.mxu0
      %v798 = vadd.f32 %v622, %v794
      %v799 = vadd.f32 %v624, %v796
      %800 = vrot.lane.b32.xlu0 %v714, 127
      %v801 = vpop.permute.xlu0 %800
      %802 = vrot.lane.b32.xlu0 %v715, 127
      %v803 = vpop.permute.xlu0 %802
      %v804 = vsel %vm371, %v801, %v803
      %v807 = vsel %vm371, %v803, -inf
      %v808 = vsel %vm356, %v804, -inf
      %v809 = vsel %vm357, %v807, -inf
      %v810 = vmax.f32 %v714, %v808
      %v811 = vmax.f32 %v715, %v809
      %812 = vrot.lane.b32.xlu0 %v714, 1
      %v813 = vpop.permute.xlu0 %812
      %814 = vrot.lane.b32.xlu0 %v715, 1
      %v815 = vpop.permute.xlu0 %814
      %v816 = vsel %vm384, %v813, %v815
      %v819 = vsel %vm384, -inf, %v813
      %v820 = vsel %vm360, %v819, -inf
      %v821 = vsel %vm361, %v816, -inf
      %v822 = vmax.f32 %v810, %v820
      %v823 = vmax.f32 %v811, %v821
      %824 = vrot.lane.b32.xlu0 %v714, 126
      %v825 = vpop.permute.xlu0 %824
      %826 = vrot.lane.b32.xlu0 %v715, 126
      %v827 = vpop.permute.xlu0 %826
      %v828 = vsel %vm397, %v825, %v827
      %v831 = vsel %vm397, %v827, -inf
      %v832 = vsel %vm358, %v828, -inf
      %v833 = vsel %vm359, %v831, -inf
      %v834 = vmax.f32 %v822, %v832
      %v835 = vmax.f32 %v823, %v833
      %836 = vrot.lane.b32.xlu0 %v714, 2
      %v837 = vpop.permute.xlu0 %836
      %838 = vrot.lane.b32.xlu0 %v715, 2
      %v839 = vpop.permute.xlu0 %838
      %v840 = vsel %vm410, %v837, %v839
      %v843 = vsel %vm410, -inf, %v837
      %v844 = vsel %vm362, %v843, -inf
      %v845 = vsel %vm363, %v840, -inf
      %v846 = vmax.f32 %v834, %v844
      %v847 = vmax.f32 %v835, %v845
      %850 = vrot.lane.b32.xlu0 %v846, 112
      %v851 = vpop.permute.xlu0 %850
      %852 = vrot.lane.b32.xlu0 %v847, 112
      %v853 = vpop.permute.xlu0 %852
      %v854 = vsel %vm425, %v851, %v853
      %v857 = vsel %vm425, %v853, -inf
      %v858 = vmax.f32 %v846, %v854
      %v859 = vmax.f32 %v847, %v857
      %860 = vrot.lane.b32.xlu0 %v846, 16
      %v861 = vpop.permute.xlu0 %860
      %862 = vrot.lane.b32.xlu0 %v847, 16
      %v863 = vpop.permute.xlu0 %862
      %v864 = vsel %vm436, %v861, %v863
      %v867 = vsel %vm436, -inf, %v861
      %v868 = vmax.f32 %v858, %v867
      %v869 = vmax.f32 %v859, %v864
      %870 = vrot.lane.b32.xlu0 %v846, 96
      %v871 = vpop.permute.xlu0 %870
      %872 = vrot.lane.b32.xlu0 %v847, 96
      %v873 = vpop.permute.xlu0 %872
      %v874 = vsel %vm447, %v871, %v873
      %v877 = vsel %vm447, %v873, -inf
      %v878 = vmax.f32 %v868, %v874
      %v879 = vmax.f32 %v869, %v877
      %880 = vrot.lane.b32.xlu0 %v846, 32
      %v881 = vpop.permute.xlu0 %880
      %882 = vrot.lane.b32.xlu0 %v847, 32
      %v883 = vpop.permute.xlu0 %882
      %v884 = vsel %vm458, %v881, %v883
      %v887 = vsel %vm458, -inf, %v881
      %v888 = vmax.f32 %v878, %v887
      %v889 = vmax.f32 %v879, %v884
      %s890 = scalar_lea.vmem %s3, 24
      %v891 = vld [vmem:[%s890] sm:$0xff]
      %v893 = vsel %vm410, %v891, 0
      %v896 = vsel %vm470, %v888, 0
      %v899 = vsel %vm470, %v889, 0
      %901 = vmatprep.subr.mxu0 %v899
      %902 = vmatpush1.msra.mxu0 %v896
      %903 = vmatprep.subr.mxu0 0.0
      %904 = vmatpush1.msra.mxu0 0.0
      %905 = vmatprep.subr.mxu0 0.0
      %906 = vmatpush1.msra.mxu0 0.0
      %907 = vmatprep.subr.mxu0 0.0
      %908 = vmatpush1.msra.mxu0 0.0
      %909 = vmatprep.subr.mxu0 0.0
      %910 = vmatpush1.msra.mxu0 0.0
      %911 = vmatprep.subr.mxu0 0.0
      %912 = vmatpush1.msra.mxu0 0.0
      %913 = vmatprep.subr.mxu0 0.0
      %914 = vmatpush1.msra.mxu0 0.0
      %915 = vmatprep.subr.mxu0 0.0
      %916 = vmatpush1.msra.mxu0 0.0
      %917 = vmatprep.subr.mxu0 0.0
      %918 = vmatpush1.msra.mxu0 0.0
      %919 = vmatprep.subr.mxu0 0.0
      %920 = vmatpush1.msra.mxu0 0.0
      %921 = vmatprep.subr.mxu0 0.0
      %922 = vmatpush1.msra.mxu0 0.0
      %923 = vmatprep.subr.mxu0 0.0
      %924 = vmatpush1.msra.mxu0 0.0
      %925 = vmatprep.subr.mxu0 0.0
      %926 = vmatpush1.msra.mxu0 0.0
      %927 = vmatprep.subr.mxu0 0.0
      %928 = vmatpush1.msra.mxu0 0.0
      %929 = vmatprep.subr.mxu0 0.0
      %930 = vmatpush1.msra.mxu0 0.0
      %931 = vmatprep.subr.mxu0 0.0
      %932 = vmatpush1.msra.mxu0 0.0
      %933 = vmatprep.subr.mxu0 0.0
      %934 = vmatpush1.msra.mxu0 0.0
      %935 = vmatprep.subr.mxu0 0.0
      %936 = vmatpush1.msra.mxu0 0.0
      %937 = vmatprep.subr.mxu0 0.0
      %938 = vmatpush1.msra.mxu0 0.0
      %939 = vmatprep.subr.mxu0 0.0
      %940 = vmatpush1.msra.mxu0 0.0
      %941 = vmatprep.subr.mxu0 0.0
      %942 = vmatpush1.msra.mxu0 0.0
      %943 = vmatprep.subr.mxu0 0.0
      %944 = vmatpush1.msra.mxu0 0.0
      %945 = vmatprep.subr.mxu0 0.0
      %946 = vmatpush1.msra.mxu0 0.0
      %947 = vmatprep.subr.mxu0 0.0
      %948 = vmatpush1.msra.mxu0 0.0
      %949 = vmatprep.subr.mxu0 0.0
      %950 = vmatpush1.msra.mxu0 0.0
      %951 = vmatprep.subr.mxu0 0.0
      %952 = vmatpush1.msra.mxu0 0.0
      %953 = vmatprep.subr.mxu0 0.0
      %954 = vmatpush1.msra.mxu0 0.0
      %955 = vmatprep.subr.mxu0 0.0
      %956 = vmatpush1.msra.mxu0 0.0
      %957 = vmatprep.subr.mxu0 0.0
      %958 = vmatpush1.msra.mxu0 0.0
      %959 = vmatprep.subr.mxu0 0.0
      %960 = vmatpush1.msra.mxu0 0.0
      %961 = vmatprep.subr.mxu0 0.0
      %962 = vmatpush1.msra.mxu0 0.0
      %963 = vmatprep.subr.mxu0 0.0
      %964 = vmatpush1.msra.mxu0 0.0
      %965 = vmatprep.mubr.f32.mxu0 0.0
      %966 = vmatmul.mubr.f32.gmra.mrb[0].mxu0 %v893
      %v967 = vpop.f32.mrb[0].mxu0
      %v968 = vadd.f32 0.0, %v967
      %v969 = vpop.f32.mrb[0].mxu0
      %v970 = vadd.f32 0.0, %v969
      %971 = vdwg.mxu0
      %v972 = vadd.f32 %v798, %v968
      %v973 = vadd.f32 %v799, %v970
      %v974 = vld [vmem:[%s4] sm:$0xff]
      %976 = vset.pattern.permute.xlu0 0
      %977 = vperm.xlu0 %976, %v974
      %v978 = vpop.permute.xlu0 %977
      %v980 = vadd.f32 %v972, %v978
      %v981 = vadd.f32 %v973, %v978
      %v982 = vxor.u32 %v980, 2147483648
      %v983 = vxor.u32 %v981, 2147483648
      %v984 = vmul.f32 %v982, 1.442695
      %v985 = vpow.pop %v984
      %v986 = vmul.f32 %v983, 1.442695
      %v987 = vpow.pop %v986
      %v988 = vadd.f32 %v985, 1.0
      %v989 = vadd.f32 %v987, 1.0
      %v990 = vrcp.pop %v988
      %v991 = vmul.f32 1.0, %v990
      %v992 = vrcp.pop %v989
      %v993 = vmul.f32 1.0, %v992
      %v994 = vmul.f32 %v980, %v991
      %v995 = vmul.f32 %v981, %v993
      %996 = vst [vmem:[%s224] sm:$0xff] %v994
      %997 = vst [vmem:[%s224 + $0x8] sm:$0xff] %v995
      %p998 = scmp.lt.s32.totalorder %s16, 1
      %s999 = scalar_select %p998, %s16, 1
      %s1000 = smul.addr %s999, 2
      %s1001 = smul.addr %s1000, 8
      %s1002 = scalar_lea.vmem %s5, %s1001
      // Predicated region
      $region41: #{spp_forward.1} parent=39 // pred_check
        %p1003 = pneg %p144
      $region42: #{spp_forward.1} parent=39 // pred_check_branch
        %1005 = sbr.rel (%p1003) target = $region44
      $region43: #{spp_forward.1} parent=39 // pred_region
        _
      $region44: #{spp_forward.1} parent=39 // pred_fallthru
        _
    $region40: #{spp_forward.1} parent=5 // pred_fallthru
      _
    %p1006 = scmp.le.s32.totalorder 2, %s11
    // Predicated region
    $region45: #{spp_forward.1} parent=5 // pred_check
      %p1007 = pneg %p1006
    $region46: #{spp_forward.1} parent=5 // pred_check_branch
      %1009 = sbr.rel (%p1007) target = $region48
    $region47: #{spp_forward.1} parent=5 // pred_region
      %s1010 = ssub.s32 %s11, 2
      // Predicated region
      $region49: #{spp_forward.1} parent=47 // pred_check
        %p1011 = pneg %p150
      $region50: #{spp_forward.1} parent=47 // pred_check_branch
        %1013 = sbr.rel (%p1011) target = $region52
      $region51: #{spp_forward.1} parent=47 // pred_region
        %p1014 = scmp.lt.s32.totalorder %s17, 1
        %s1015 = scalar_select %p1014, %s17, 1
        %s1016 = smul.addr %s1015, 2
        %s1017 = smul.addr %s1016, 8
        %s1018 = scalar_lea.vmem %s5, %s1017
      $region52: #{spp_forward.1} parent=47 // pred_fallthru
        _
    $region48: #{spp_forward.1} parent=5 // pred_fallthru
      _
  $region6: #{spp_forward.1} parent=0 // loop_footer
    %s15 = sadd.s32 1, %s11
  $region7: #{spp_forward.1} parent=0 // loop_footer_branch
    %10 = sbr.rel target = $region3
  $region8: #{spp_forward.1} parent=0 // loop_exit
    _

</llo_original>
